<compile_context>
chip_gen: v6e
topology: v6e:2x2x1
jax: 0.10.0
libtpu: 0.0.40
codegen_flags: <defaults>
</compile_context>

<pallas_src>
import functools

import jax
import jax.numpy as jnp
from jax import lax
from jax.experimental import pallas as pl
from jax.experimental.pallas import tpu as pltpu

LN_EPS = 1e-5  # torch.nn.LayerNorm default eps


def _round_up(x, m):
    return ((x + m - 1) // m) * m


def _erf(x):
    # Abramowitz & Stegun 7.1.26 rational approximation of erf (|err| ~ 1.5e-7).
    p = 0.3275911
    a1, a2, a3, a4, a5 = (0.254829592, -0.284496736, 1.421413741,
                          -1.453152027, 1.061405429)
    sign = jnp.where(x >= 0.0, 1.0, -1.0)
    z = jnp.abs(x)
    t = 1.0 / (1.0 + p * z)
    poly = ((((a5 * t + a4) * t + a3) * t + a2) * t + a1) * t
    return sign * (1.0 - poly * jnp.exp(-z * z))


# ----------------------------------------------------------------------------
# Pallas kernel: per-tap matmul accumulation + bias [-> LayerNorm] [-> GELU]
# ----------------------------------------------------------------------------
def _conv_kernel(x_ref, w_ref, s_ref, o_ref, *, TH, Wo, QH, QW, CP, do_ln, do_gelu):
    # x_ref : (Hq, Wq, CP)        bf16 phase-split input image (one batch)
    # w_ref : (QH*QW, CP, Cout)   bf16 phase-packed weights (resident)
    # s_ref : (3, Cout)           f32 packed [bias; gamma; beta] (resident)
    # o_ref : (TH, Wo, Cout)      bf16 output row-band (lane size == true Cout)
    Cout = o_ref.shape[-1]
    row0 = pl.multiple_of(pl.program_id(1) * TH, TH)

    acc = jnp.zeros((TH * Wo, Cout), jnp.float32)
    for qi in range(QH):
        for qj in range(QW):
            # contiguous tap window (all stride phases live in the channel dim)
            xt = x_ref[pl.ds(row0 + qi, TH), pl.ds(qj, Wo), :]       # (TH, Wo, CP)
            a = xt.reshape(TH * Wo, CP)
            acc = acc + jnp.dot(a, w_ref[qi * QW + qj],
                                preferred_element_type=jnp.float32)

    y = acc + s_ref[0:1, :]                                           # + bias
    if do_ln:
        # two-pass LayerNorm statistics over the (true) channel dim
        mean = jnp.mean(y, axis=-1, keepdims=True)
        d = y - mean
        var = jnp.mean(d * d, axis=-1, keepdims=True)
        y = d * lax.rsqrt(var + LN_EPS) * s_ref[1:2, :] + s_ref[2:3, :]
    if do_gelu:
        # exact (erf-based) GELU, matching nn.GELU() default
        y = 0.5 * y * (1.0 + _erf(y * 0.7071067811865475))

    o_ref[...] = y.reshape(TH, Wo, Cout).astype(o_ref.dtype)


# ----------------------------------------------------------------------------
# Wrapper: NHWC conv via phase-split input + fused Pallas kernel
# ----------------------------------------------------------------------------
def conv2d_nhwc(x, w_torch, bias, *, stride, pad, ln=None, gelu=False,
                target_rows=2048):
    """Channel-last 2D conv (+ optional fused LayerNorm / GELU), bf16 output.

    x:        (B, H, W, Cin)  NHWC (any float dtype; cast to bf16 internally)
    w_torch:  (Cout, Cin, KH, KW)  PyTorch conv weight layout
    bias:     (Cout,)
    ln:       optional (gamma, beta), each (Cout,) -> channel LayerNorm
    gelu:     fuse exact GELU after (optional) LayerNorm
    """
    B, H, W, Cin = x.shape
    Cout, Cin_w, KH, KW = w_torch.shape
    assert Cin == Cin_w
    s = stride
    Ho = (H + 2 * pad - KH) // s + 1
    Wo = (W + 2 * pad - KW) // s + 1
    QH = (KH - 1) // s + 1           # number of distinct row offsets in phase coords
    QW = (KW - 1) // s + 1
    CP = s * s * Cin                 # channels after stride-phase split
    Hq = Ho + (QH - 1)               # phase-split spatial extents (incl. halo)
    Wq = Wo + (QW - 1)
    Hp, Wp = s * Hq, s * Wq

    # ---- glue (XLA): pad + stride-phase split (~1x input bytes, no KxK dup) ----
    xb = x.astype(jnp.bfloat16)
    rows_needed = Hp - pad
    cols_needed = Wp - pad
    xb = xb[:, :min(H, rows_needed), :min(W, cols_needed), :]
    pad_b = max(0, rows_needed - xb.shape[1])
    pad_r = max(0, cols_needed - xb.shape[2])
    xp = jnp.pad(xb, ((0, 0), (pad, pad_b), (pad, pad_r), (0, 0)))
    xps = xp.reshape(B, Hq, s, Wq, s, Cin)
    xps = jnp.transpose(xps, (0, 1, 3, 2, 4, 5)).reshape(B, Hq, Wq, CP)

    # ---- glue: weights -> (QH*QW, CP, Cout) bf16, zeros on invalid phase taps ----
    w_t = jnp.transpose(w_torch, (2, 3, 1, 0)).astype(jnp.float32)   # (KH,KW,Cin,Cout)
    w_t = jnp.pad(w_t, ((0, QH * s - KH), (0, QW * s - KW), (0, 0), (0, 0)))
    w_q = w_t.reshape(QH, s, QW, s, Cin, Cout)
    w_q = jnp.transpose(w_q, (0, 2, 1, 3, 4, 5)).reshape(QH * QW, CP, Cout)
    w_q = w_q.astype(jnp.bfloat16)

    # ---- glue: pack bias / gamma / beta into one resident (3, Cout) array ----
    scales = jnp.zeros((3, Cout), jnp.float32)
    scales = scales.at[0].set(bias.astype(jnp.float32))
    if ln is not None:
        scales = scales.at[1].set(ln[0].astype(jnp.float32))
        scales = scales.at[2].set(ln[1].astype(jnp.float32))

    # ---- row-tile choice: ~target_rows matmul rows/step, but keep >=4 grid
    #      steps when possible so v7x megacore has work on both TensorCores ----
    th_max = max(1, min(target_rows // max(Wo, 1), Ho))
    if B * Ho >= 4:
        th_max = max(1, min(th_max, (B * Ho) // 4))
    TH = max(d for d in range(1, th_max + 1) if Ho % d == 0)
    nT = Ho // TH

    # ---- explicit VMEM budget from (lane/sublane padded) block sizes ----
    lane = lambda c: _round_up(c, 128)
    sub = lambda v: _round_up(v, 16)
    in_blk = Hq * sub(Wq) * lane(CP) * 2
    out_blk = TH * sub(Wo) * lane(Cout) * 2
    w_blk = QH * QW * sub(CP) * lane(Cout) * 2
    s_blk = 8 * lane(Cout) * 4
    tmp = TH * sub(Wo) * lane(CP) * 2 + sub(TH * Wo) * lane(Cout) * 4
    vmem_need = 2 * (in_blk + out_blk + w_blk + s_blk) + 2 * tmp
    vmem_limit = int(min(64 * 1024 * 1024,
                         max(16 * 1024 * 1024, int(1.25 * vmem_need))))

    kernel = functools.partial(
        _conv_kernel, TH=TH, Wo=Wo, QH=QH, QW=QW, CP=CP,
        do_ln=ln is not None, do_gelu=gelu)

    out = pl.pallas_call(
        kernel,
        out_shape=jax.ShapeDtypeStruct((B, Ho, Wo, Cout), jnp.bfloat16),
        grid=(B, nT),
        in_specs=[
            # whole phase-split image for batch b; block index only depends on b,
            # so the pipeline fetches it once per image (revisited across t)
            pl.BlockSpec((None, Hq, Wq, CP), lambda b, t: (b, 0, 0, 0)),
            pl.BlockSpec((QH * QW, CP, Cout), lambda b, t: (0, 0, 0)),   # resident
            pl.BlockSpec((3, Cout), lambda b, t: (0, 0)),                # resident
        ],
        out_specs=pl.BlockSpec((None, TH, Wo, Cout), lambda b, t: (b, t, 0, 0)),
        compiler_params=pltpu.CompilerParams(
            dimension_semantics=("parallel", "parallel"),
            vmem_limit_bytes=vmem_limit,
        ),
    )(xps, w_q, scales)
    return out


# ----------------------------------------------------------------------------
# Parameter construction (deterministic, mirrors VSSM_Encoder.__init__ shapes)
# ----------------------------------------------------------------------------
def init_vssm_encoder_params(key, input_channels, patch_size, n_stages,
                             features_per_stage, kernel_sizes, strides, padding):
    def conv_w(k, cout, cin, kh, kw):
        return 0.05 * jax.random.normal(k, (cout, cin, kh, kw), jnp.float32)

    keys = jax.random.split(key, 4 + 2 * n_stages)
    stride0 = patch_size // 2
    ks0 = stride0 + 1
    c_half = features_per_stage[0] // 2
    c_full = features_per_stage[0]

    params = {
        "patch_embed": {
            "stride": stride0,
            "pad": 1,
            "w1": conv_w(keys[0], c_half, input_channels, ks0, ks0),
            "b1": 0.05 * jax.random.normal(keys[1], (c_half,), jnp.float32),
            "g1": jnp.ones((c_half,), jnp.float32),
            "be1": jnp.zeros((c_half,), jnp.float32),
            "w2": conv_w(keys[2], c_full, c_half, ks0, ks0),
            "b2": 0.05 * jax.random.normal(keys[3], (c_full,), jnp.float32),
            "g2": jnp.ones((c_full,), jnp.float32),
            "be2": jnp.zeros((c_full,), jnp.float32),
        },
        "stages": [],
    }
    in_ch = features_per_stage[0]
    for s in range(1, n_stages):
        kk = kernel_sizes[s]
        params["stages"].append({
            "w": conv_w(keys[4 + 2 * s], features_per_stage[s], in_ch, kk, kk),
            "b": 0.05 * jax.random.normal(keys[5 + 2 * s],
                                          (features_per_stage[s],), jnp.float32),
            "stride": strides[s],
            "pad": padding[s],
        })
        in_ch = features_per_stage[s]
    # TODO(synk): LatentGuidedAttention / latent_pool params are only used when
    # forward(..., post != None); the post=None path implemented here never
    # executes them and their class definition was not provided.
    return params


# ----------------------------------------------------------------------------
# Forward (post=None path of VSSM_Encoder.forward)
# ----------------------------------------------------------------------------
def vssm_encoder_forward(x_nchw, params, return_skips=False):
    # PyTorch NCHW input -> NHWC once; the module itself is channel-last after
    # the patch embed.  Intermediate activations stay bf16 between layers.
    x = jnp.transpose(x_nchw, (0, 2, 3, 1))

    pe = params["patch_embed"]
    # stage 0: _make_patch_embed_v2 = Conv -> LN -> GELU -> Conv -> LN
    x = conv2d_nhwc(x, pe["w1"], pe["b1"], stride=pe["stride"], pad=pe["pad"],
                    ln=(pe["g1"], pe["be1"]), gelu=True)
    x = conv2d_nhwc(x, pe["w2"], pe["b2"], stride=pe["stride"], pad=pe["pad"],
                    ln=(pe["g2"], pe["be2"]), gelu=False)
    skips = [x]

    for st in params["stages"]:
        # Conv2d_channel_last downsample conv (NHWC in / NHWC out)
        x = conv2d_nhwc(x, st["w"], st["b"], stride=st["stride"], pad=st["pad"])
        # TODO(synk): VSSBlock(hidden_dim, ssm_init='v2', forward_type='v2_noz')
        # definition is not provided in the reference module; treated as identity.
        skips.append(x)

    if return_skips:
        return [s.astype(jnp.float32) for s in skips]
    return skips[-1].astype(jnp.float32)


# ----------------------------------------------------------------------------
if __name__ == "__main__":
    key = jax.random.PRNGKey(0)
    k_x, k_p = jax.random.split(key)

    # Small config consistent with the module's __init__:
    input_channels = 4
    patch_size = 4
    n_stages = 4
    features_per_stage = [16, 32, 64, 128]
    kernel_sizes = [3, 3, 3, 3]
    strides = [1, 2, 2, 2]
    padding = [1, 1, 1, 1]

    x = jax.random.normal(k_x, (2, input_channels, 16, 16), jnp.float32)  # NCHW input

    params = init_vssm_encoder_params(
        k_p, input_channels, patch_size, n_stages,
        features_per_stage, kernel_sizes, strides, padding)

    out = vssm_encoder_forward(x, params, return_skips=False)
    out = jax.block_until_ready(out)

    assert out.shape == (2, 1, 1, features_per_stage[-1]), out.shape
    assert bool(jnp.all(jnp.isfinite(out)))
    print("KERNEL_OK")
</pallas_src>

<mosaic_0001>
module attributes {stable_mosaic.version = 11 : i64} {
  func.func @_conv_kernel(%arg0: i32, %arg1: i32, %arg2: memref<1x9x9x16xbf16, #tpu.memory_space<vmem>>, %arg3: memref<4x16x8xbf16, #tpu.memory_space<vmem>>, %arg4: memref<3x8xf32, #tpu.memory_space<vmem>>, %arg5: memref<1x4x8x8xbf16, #tpu.memory_space<vmem>>) attributes {dimension_semantics = [#tpu.dimension_semantics<parallel>, #tpu.dimension_semantics<parallel>], iteration_bounds = array<i64: 2, 2>, scalar_prefetch = 0 : i64, scratch_operands = 0 : i64, tpu.core_type = #tpu.core_type<tc>, window_params = [{transform_indices = @transform_0, window_bounds = array<i64: 1, 9, 9, 16>}, {pipeline_mode = #tpu.pipeline_mode<synchronous>, transform_indices = @transform_1, window_bounds = array<i64: 4, 16, 8>}, {pipeline_mode = #tpu.pipeline_mode<synchronous>, transform_indices = @transform_2, window_bounds = array<i64: 3, 8>}, {transform_indices = @transform_3, window_bounds = array<i64: 1, 4, 8, 8>}]} {
    %c4_i32 = arith.constant 4 : i32
    %0 = arith.muli %arg1, %c4_i32 : i32
    %1 = tpu.assume_multiple %0, 4 : i32
    %cst = arith.constant 0.000000e+00 : f32
    %2 = vector.broadcast %cst : f32 to vector<32x8xf32>
    %c0_i32 = arith.constant 0 : i32
    %3 = arith.addi %1, %c0_i32 : i32
    %c0 = arith.constant 0 : index
    %4 = arith.index_cast %3 : i32 to index
    %c0_0 = arith.constant 0 : index
    %c0_1 = arith.constant 0 : index
    %5 = vector.load %arg2[%c0, %4, %c0_0, %c0_1] : memref<1x9x9x16xbf16, #tpu.memory_space<vmem>>, vector<1x4x8x16xbf16>
    %6 = vector.shape_cast %5 : vector<1x4x8x16xbf16> to vector<4x8x16xbf16>
    %7 = vector.shape_cast %6 : vector<4x8x16xbf16> to vector<32x16xbf16>
    %c0_2 = arith.constant 0 : index
    %c0_3 = arith.constant 0 : index
    %c0_4 = arith.constant 0 : index
    %8 = vector.load %arg3[%c0_2, %c0_3, %c0_4] : memref<4x16x8xbf16, #tpu.memory_space<vmem>>, vector<1x16x8xbf16>
    %9 = vector.shape_cast %8 : vector<1x16x8xbf16> to vector<16x8xbf16>
    %cst_5 = arith.constant dense<0.000000e+00> : vector<32x8xf32>
    %10 = tpu.matmul %7, %9, %cst_5 {dimension_numbers = #tpu.dot_dimension_numbers<[1], [0], [0], [1], [0, 0, 1, 1], [], []>} : vector<32x16xbf16>, vector<16x8xbf16>, vector<32x8xf32> -> vector<32x8xf32>
    %11 = arith.addf %2, %10 : vector<32x8xf32>
    %c0_i32_6 = arith.constant 0 : i32
    %12 = arith.addi %1, %c0_i32_6 : i32
    %c0_7 = arith.constant 0 : index
    %13 = arith.index_cast %12 : i32 to index
    %c1 = arith.constant 1 : index
    %c0_8 = arith.constant 0 : index
    %14 = vector.load %arg2[%c0_7, %13, %c1, %c0_8] : memref<1x9x9x16xbf16, #tpu.memory_space<vmem>>, vector<1x4x8x16xbf16>
    %15 = vector.shape_cast %14 : vector<1x4x8x16xbf16> to vector<4x8x16xbf16>
    %16 = vector.shape_cast %15 : vector<4x8x16xbf16> to vector<32x16xbf16>
    %c1_9 = arith.constant 1 : index
    %c0_10 = arith.constant 0 : index
    %c0_11 = arith.constant 0 : index
    %17 = vector.load %arg3[%c1_9, %c0_10, %c0_11] : memref<4x16x8xbf16, #tpu.memory_space<vmem>>, vector<1x16x8xbf16>
    %18 = vector.shape_cast %17 : vector<1x16x8xbf16> to vector<16x8xbf16>
    %cst_12 = arith.constant dense<0.000000e+00> : vector<32x8xf32>
    %19 = tpu.matmul %16, %18, %cst_12 {dimension_numbers = #tpu.dot_dimension_numbers<[1], [0], [0], [1], [0, 0, 1, 1], [], []>} : vector<32x16xbf16>, vector<16x8xbf16>, vector<32x8xf32> -> vector<32x8xf32>
    %20 = arith.addf %11, %19 : vector<32x8xf32>
    %c1_i32 = arith.constant 1 : i32
    %21 = arith.addi %1, %c1_i32 : i32
    %c0_13 = arith.constant 0 : index
    %22 = arith.index_cast %21 : i32 to index
    %c0_14 = arith.constant 0 : index
    %c0_15 = arith.constant 0 : index
    %23 = vector.load %arg2[%c0_13, %22, %c0_14, %c0_15] : memref<1x9x9x16xbf16, #tpu.memory_space<vmem>>, vector<1x4x8x16xbf16>
    %24 = vector.shape_cast %23 : vector<1x4x8x16xbf16> to vector<4x8x16xbf16>
    %25 = vector.shape_cast %24 : vector<4x8x16xbf16> to vector<32x16xbf16>
    %c2 = arith.constant 2 : index
    %c0_16 = arith.constant 0 : index
    %c0_17 = arith.constant 0 : index
    %26 = vector.load %arg3[%c2, %c0_16, %c0_17] : memref<4x16x8xbf16, #tpu.memory_space<vmem>>, vector<1x16x8xbf16>
    %27 = vector.shape_cast %26 : vector<1x16x8xbf16> to vector<16x8xbf16>
    %cst_18 = arith.constant dense<0.000000e+00> : vector<32x8xf32>
    %28 = tpu.matmul %25, %27, %cst_18 {dimension_numbers = #tpu.dot_dimension_numbers<[1], [0], [0], [1], [0, 0, 1, 1], [], []>} : vector<32x16xbf16>, vector<16x8xbf16>, vector<32x8xf32> -> vector<32x8xf32>
    %29 = arith.addf %20, %28 : vector<32x8xf32>
    %c1_i32_19 = arith.constant 1 : i32
    %30 = arith.addi %1, %c1_i32_19 : i32
    %c0_20 = arith.constant 0 : index
    %31 = arith.index_cast %30 : i32 to index
    %c1_21 = arith.constant 1 : index
    %c0_22 = arith.constant 0 : index
    %32 = vector.load %arg2[%c0_20, %31, %c1_21, %c0_22] : memref<1x9x9x16xbf16, #tpu.memory_space<vmem>>, vector<1x4x8x16xbf16>
    %33 = vector.shape_cast %32 : vector<1x4x8x16xbf16> to vector<4x8x16xbf16>
    %34 = vector.shape_cast %33 : vector<4x8x16xbf16> to vector<32x16xbf16>
    %c3 = arith.constant 3 : index
    %c0_23 = arith.constant 0 : index
    %c0_24 = arith.constant 0 : index
    %35 = vector.load %arg3[%c3, %c0_23, %c0_24] : memref<4x16x8xbf16, #tpu.memory_space<vmem>>, vector<1x16x8xbf16>
    %36 = vector.shape_cast %35 : vector<1x16x8xbf16> to vector<16x8xbf16>
    %cst_25 = arith.constant dense<0.000000e+00> : vector<32x8xf32>
    %37 = tpu.matmul %34, %36, %cst_25 {dimension_numbers = #tpu.dot_dimension_numbers<[1], [0], [0], [1], [0, 0, 1, 1], [], []>} : vector<32x16xbf16>, vector<16x8xbf16>, vector<32x8xf32> -> vector<32x8xf32>
    %38 = arith.addf %29, %37 : vector<32x8xf32>
    %c0_26 = arith.constant 0 : index
    %c0_27 = arith.constant 0 : index
    %39 = vector.load %arg4[%c0_26, %c0_27] : memref<3x8xf32, #tpu.memory_space<vmem>>, vector<1x8xf32>
    %40 = vector.broadcast %39 : vector<1x8xf32> to vector<32x8xf32>
    %41 = arith.addf %38, %40 : vector<32x8xf32>
    %cst_28 = arith.constant dense<0.000000e+00> : vector<32xf32>
    %42 = vector.multi_reduction <add>, %41, %cst_28 [1] : vector<32x8xf32> to vector<32xf32>
    %43 = vector.shape_cast %42 : vector<32xf32> to vector<32x1xf32>
    %cst_29 = arith.constant 8.000000e+00 : f32
    %44 = vector.broadcast %cst_29 : f32 to vector<32x1xf32>
    %45 = arith.divf %43, %44 : vector<32x1xf32>
    %46 = vector.broadcast %45 : vector<32x1xf32> to vector<32x8xf32>
    %47 = arith.subf %41, %46 : vector<32x8xf32>
    %48 = arith.mulf %47, %47 : vector<32x8xf32>
    %cst_30 = arith.constant dense<0.000000e+00> : vector<32xf32>
    %49 = vector.multi_reduction <add>, %48, %cst_30 [1] : vector<32x8xf32> to vector<32xf32>
    %50 = vector.shape_cast %49 : vector<32xf32> to vector<32x1xf32>
    %cst_31 = arith.constant 8.000000e+00 : f32
    %51 = vector.broadcast %cst_31 : f32 to vector<32x1xf32>
    %52 = arith.divf %50, %51 : vector<32x1xf32>
    %cst_32 = arith.constant 9.99999974E-6 : f32
    %53 = vector.broadcast %cst_32 : f32 to vector<32x1xf32>
    %54 = arith.addf %52, %53 : vector<32x1xf32>
    %55 = math.rsqrt %54 : vector<32x1xf32>
    %56 = vector.broadcast %55 : vector<32x1xf32> to vector<32x8xf32>
    %57 = arith.mulf %47, %56 : vector<32x8xf32>
    %c1_33 = arith.constant 1 : index
    %c0_34 = arith.constant 0 : index
    %58 = vector.load %arg4[%c1_33, %c0_34] : memref<3x8xf32, #tpu.memory_space<vmem>>, vector<1x8xf32>
    %59 = vector.broadcast %58 : vector<1x8xf32> to vector<32x8xf32>
    %60 = arith.mulf %57, %59 : vector<32x8xf32>
    %c2_35 = arith.constant 2 : index
    %c0_36 = arith.constant 0 : index
    %61 = vector.load %arg4[%c2_35, %c0_36] : memref<3x8xf32, #tpu.memory_space<vmem>>, vector<1x8xf32>
    %62 = vector.broadcast %61 : vector<1x8xf32> to vector<32x8xf32>
    %63 = arith.addf %60, %62 : vector<32x8xf32>
    %cst_37 = arith.constant 5.000000e-01 : f32
    %64 = vector.broadcast %cst_37 : f32 to vector<32x8xf32>
    %65 = arith.mulf %64, %63 : vector<32x8xf32>
    %cst_38 = arith.constant 0.707106769 : f32
    %66 = vector.broadcast %cst_38 : f32 to vector<32x8xf32>
    %67 = arith.mulf %63, %66 : vector<32x8xf32>
    %cst_39 = arith.constant 0.000000e+00 : f32
    %68 = vector.broadcast %cst_39 : f32 to vector<32x8xf32>
    %69 = arith.cmpf oge, %67, %68 : vector<32x8xf32>
    %cst_40 = arith.constant 1.000000e+00 : f32
    %cst_41 = arith.constant -1.000000e+00 : f32
    %70 = vector.broadcast %cst_40 : f32 to vector<32x8xf32>
    %71 = vector.broadcast %cst_41 : f32 to vector<32x8xf32>
    %72 = arith.select %69, %70, %71 : vector<32x8xi1>, vector<32x8xf32>
    %73 = math.absf %67 : vector<32x8xf32>
    %cst_42 = arith.constant 0.327591091 : f32
    %74 = vector.broadcast %cst_42 : f32 to vector<32x8xf32>
    %75 = arith.mulf %74, %73 : vector<32x8xf32>
    %cst_43 = arith.constant 1.000000e+00 : f32
    %76 = vector.broadcast %cst_43 : f32 to vector<32x8xf32>
    %77 = arith.addf %76, %75 : vector<32x8xf32>
    %cst_44 = arith.constant 1.000000e+00 : f32
    %78 = vector.broadcast %cst_44 : f32 to vector<32x8xf32>
    %79 = arith.divf %78, %77 : vector<32x8xf32>
    %cst_45 = arith.constant 1.06140542 : f32
    %80 = vector.broadcast %cst_45 : f32 to vector<32x8xf32>
    %81 = arith.mulf %80, %79 : vector<32x8xf32>
    %cst_46 = arith.constant -1.45315206 : f32
    %82 = vector.broadcast %cst_46 : f32 to vector<32x8xf32>
    %83 = arith.addf %81, %82 : vector<32x8xf32>
    %84 = arith.mulf %83, %79 : vector<32x8xf32>
    %cst_47 = arith.constant 1.42141378 : f32
    %85 = vector.broadcast %cst_47 : f32 to vector<32x8xf32>
    %86 = arith.addf %84, %85 : vector<32x8xf32>
    %87 = arith.mulf %86, %79 : vector<32x8xf32>
    %cst_48 = arith.constant -0.284496725 : f32
    %88 = vector.broadcast %cst_48 : f32 to vector<32x8xf32>
    %89 = arith.addf %87, %88 : vector<32x8xf32>
    %90 = arith.mulf %89, %79 : vector<32x8xf32>
    %cst_49 = arith.constant 0.254829586 : f32
    %91 = vector.broadcast %cst_49 : f32 to vector<32x8xf32>
    %92 = arith.addf %90, %91 : vector<32x8xf32>
    %93 = arith.mulf %92, %79 : vector<32x8xf32>
    %cst_50 = arith.constant 0.000000e+00 : f32
    %94 = vector.broadcast %cst_50 : f32 to vector<32x8xf32>
    %95 = arith.subf %94, %73 : vector<32x8xf32>
    %96 = arith.mulf %95, %73 : vector<32x8xf32>
    %97 = math.exp %96 : vector<32x8xf32>
    %98 = arith.mulf %93, %97 : vector<32x8xf32>
    %cst_51 = arith.constant 1.000000e+00 : f32
    %99 = vector.broadcast %cst_51 : f32 to vector<32x8xf32>
    %100 = arith.subf %99, %98 : vector<32x8xf32>
    %101 = arith.mulf %72, %100 : vector<32x8xf32>
    %cst_52 = arith.constant 1.000000e+00 : f32
    %102 = vector.broadcast %cst_52 : f32 to vector<32x8xf32>
    %103 = arith.addf %102, %101 : vector<32x8xf32>
    %104 = arith.mulf %65, %103 : vector<32x8xf32>
    %105 = vector.shape_cast %104 : vector<32x8xf32> to vector<4x8x8xf32>
    %106 = arith.truncf %105 : vector<4x8x8xf32> to vector<4x8x8xbf16>
    %c0_53 = arith.constant 0 : index
    %c0_54 = arith.constant 0 : index
    %c0_55 = arith.constant 0 : index
    %c0_56 = arith.constant 0 : index
    %107 = vector.load %arg5[%c0_53, %c0_54, %c0_55, %c0_56] : memref<1x4x8x8xbf16, #tpu.memory_space<vmem>>, vector<1x4x8x8xbf16>
    %108 = vector.shape_cast %107 : vector<1x4x8x8xbf16> to vector<4x8x8xbf16>
    %109 = vector.shape_cast %106 : vector<4x8x8xbf16> to vector<1x4x8x8xbf16>
    tpu.vector_store %arg5[%c0_53, %c0_54, %c0_55, %c0_56], %109 {strides = array<i32>} : memref<1x4x8x8xbf16, #tpu.memory_space<vmem>>, vector<1x4x8x8xbf16>,
    return
  }
  func.func @transform_0(%arg0: i32, %arg1: i32) -> (i32, i32, i32, i32) {
    %c0_i32 = arith.constant 0 : i32
    %c0_i32_0 = arith.constant 0 : i32
    %c0_i32_1 = arith.constant 0 : i32
    %c0_i32_2 = arith.constant 0 : i32
    return %arg0, %c0_i32, %c0_i32_0, %c0_i32_1 : i32, i32, i32, i32
  }
  func.func @transform_1(%arg0: i32, %arg1: i32) -> (i32, i32, i32) {
    %c0_i32 = arith.constant 0 : i32
    %c0_i32_0 = arith.constant 0 : i32
    %c0_i32_1 = arith.constant 0 : i32
    %c0_i32_2 = arith.constant 0 : i32
    return %c0_i32, %c0_i32_0, %c0_i32_1 : i32, i32, i32
  }
  func.func @transform_2(%arg0: i32, %arg1: i32) -> (i32, i32) {
    %c0_i32 = arith.constant 0 : i32
    %c0_i32_0 = arith.constant 0 : i32
    %c0_i32_1 = arith.constant 0 : i32
    return %c0_i32, %c0_i32_0 : i32, i32
  }
  func.func @transform_3(%arg0: i32, %arg1: i32) -> (i32, i32, i32, i32) {
    %c0_i32 = arith.constant 0 : i32
    %c0_i32_0 = arith.constant 0 : i32
    %c0_i32_1 = arith.constant 0 : i32
    return %arg0, %arg1, %c0_i32, %c0_i32_0 : i32, i32, i32, i32
  }
}

</mosaic_0001>

<llo_original>
// kernel: tpu_custom_call.1
$region0: #{tpu_custom_call.1}
  #allocation0 [shape = 'u32[]', space=smem, size = 0x4, offset = 0x4, fixed_abs, tag = 'smem constant byte address 0x4 - core index']
  #allocation1 [shape = 'u32[144,128]{1,0:T(1,128)}', space=vmem, size = 0x12000, scoped, tag = 'internal scratch']
  %s0 = inlined_call_operand.vmem [shape: bf16[2,9,9,16], index: 0, kind: input, shape index: {}]
  %s1 = inlined_call_operand.vmem [shape: bf16[4,16,8], index: 1, kind: input, shape index: {}]
  %s2 = inlined_call_operand.vmem [shape: f32[3,8], index: 2, kind: input, shape index: {}]
  %s3 = inlined_call_operand.hbm [shape: bf16[2,8,8,8], index: 3, kind: output, shape index: {}]
  %s4 = sld [smem:[#allocation0]]
  $region45: #{tpu_custom_call.1} parent=0
    _
  %s6 = ssub.s32 1, %s4
  %s7 = scalar_select 0, %s6, %s4
  $region1: #{tpu_custom_call.1} parent=0
    #allocation2 [shape = 'u8[16384]{0}', space=vmem, size = 0x4000, scoped, tag = 'output window, operand 0']
    #allocation3 [shape = 's32[2]{0}', space=sflag, size = 0x8, scoped, tag = 'scoped memory for tpu_custom_call.1']
    %8 = vsyncpa [#allocation3], 0
    %s9 = scalar_lea.sflag [#allocation3], 1
    %10 = vsyncpa %s9, 0
    loop: start=0, step=1, limit=6
    $region2: #{tpu_custom_call.1} parent=1 // loop_pre_header
      _
    $region3: #{tpu_custom_call.1} parent=1 // loop_header
      %s12 = sphi 0, %s16
      %p13 = scmp.ge.s32.totalorder %s12, 6
      %s19 = sphi 0, %s31
      %s20 = sphi 0, %s27
      %s21 = sphi 0, %s19
      %s22 = sphi 0, %s20
      %s23 = sphi 0, %s21
      %s24 = sphi 0, %s22
      %s34 = sphi 0, %s36
      %s37 = sphi 0, %s34
      %s38 = sphi 0, %s37
      %s54 = sphi 0, %s38
      %s58 = sphi 0, %s58
      %s60 = sphi 0, %s58
      %s61 = sphi 0, %s60
      %s75 = sphi 0, %s61
      %s79 = sphi 0, %s79
      %s81 = sphi 0, %s79
      %s82 = sphi 0, %s81
      %s96 = sphi 0, %s82
      %s104 = sphi 0, %s106
      %s107 = sphi 0, %s104
      %s108 = sphi 0, %s107
      %s124 = sphi 0, %s108
    $region4: #{tpu_custom_call.1} parent=1 // loop_header_branch
      %15 = sbr.rel (%p13) target = $region8
    $region5: #{tpu_custom_call.1} parent=1 // loop_body
      %s17 = ssub.s32 %s12, 1
      %s18 = ssub.s32 %s12, 2
      %s25 = sadd.s32 1, %s20
      %p26 = scmp.ge.s32.totalorder %s25, 2
      %s27 = scalar_select %p26, 0, %s25
      %s28 = sadd.s32 1, %s19
      %s29 = scalar_select %p26, %s28, %s19
      %p30 = scmp.ge.s32.totalorder %s29, 2
      %s31 = scalar_select %p30, 0, %s29
      %s32 = ssub.s32 %s19, %s31
      %p33 = scmp.eq.s32.totalorder %s32, 0
      %s35 = sadd.s32 %s34, 1
      %s36 = scalar_select %p33, %s34, %s35
      %p39 = pneg %p33
      %p40 = scmp.eq.s32.totalorder %s12, 3
      %p41 = por %p39, %p40
      %p42 = scmp.ne.s32.totalorder %s34, %s37
      %p43 = scmp.eq.s32.totalorder %s12, 0
      %p44 = por %p42, %p43
      %p45 = scmp.ne.s32.totalorder %s34, %s37
      %p46 = scmp.eq.s32.totalorder %s17, 3
      %p47 = por %p45, %p46
      %p48 = scmp.ne.s32.totalorder %s37, %s38
      %p49 = scmp.eq.s32.totalorder %s17, 0
      %p50 = por %p48, %p49
      %p51 = scmp.ne.s32.totalorder %s37, %s38
      %p52 = scmp.eq.s32.totalorder %s18, 3
      %p53 = por %p51, %p52
      %p55 = scmp.ne.s32.totalorder %s38, %s54
      %p56 = scmp.eq.s32.totalorder %s18, 0
      %p57 = por %p55, %p56
      %s59 = sadd.s32 %s58, 1
      %p62 = scmp.eq.s32.totalorder %s12, 3
      %p63 = scmp.ne.s32.totalorder %s58, %s60
      %p64 = scmp.eq.s32.totalorder %s12, 0
      %p65 = por %p63, %p64
      %p66 = scmp.ne.s32.totalorder %s58, %s60
      %p67 = scmp.eq.s32.totalorder %s17, 3
      %p68 = por %p66, %p67
      %p69 = scmp.ne.s32.totalorder %s60, %s61
      %p70 = scmp.eq.s32.totalorder %s17, 0
      %p71 = por %p69, %p70
      %p72 = scmp.ne.s32.totalorder %s60, %s61
      %p73 = scmp.eq.s32.totalorder %s18, 3
      %p74 = por %p72, %p73
      %p76 = scmp.ne.s32.totalorder %s61, %s75
      %p77 = scmp.eq.s32.totalorder %s18, 0
      %p78 = por %p76, %p77
      %s80 = sadd.s32 %s79, 1
      %p83 = scmp.eq.s32.totalorder %s12, 3
      %p84 = scmp.ne.s32.totalorder %s79, %s81
      %p85 = scmp.eq.s32.totalorder %s12, 0
      %p86 = por %p84, %p85
      %p87 = scmp.ne.s32.totalorder %s79, %s81
      %p88 = scmp.eq.s32.totalorder %s17, 3
      %p89 = por %p87, %p88
      %p90 = scmp.ne.s32.totalorder %s81, %s82
      %p91 = scmp.eq.s32.totalorder %s17, 0
      %p92 = por %p90, %p91
      %p93 = scmp.ne.s32.totalorder %s81, %s82
      %p94 = scmp.eq.s32.totalorder %s18, 3
      %p95 = por %p93, %p94
      %p97 = scmp.ne.s32.totalorder %s82, %s96
      %p98 = scmp.eq.s32.totalorder %s18, 0
      %p99 = por %p97, %p98
      %s100 = ssub.s32 %s19, %s31
      %s101 = ssub.s32 %s20, %s27
      %s102 = sor.u32 %s100, %s101
      %p103 = scmp.eq.s32.totalorder %s102, 0
      %s105 = sadd.s32 %s104, 1
      %s106 = scalar_select %p103, %s104, %s105
      %p109 = pneg %p103
      %p110 = scmp.eq.s32.totalorder %s12, 3
      %p111 = por %p109, %p110
      %p112 = scmp.ne.s32.totalorder %s104, %s107
      %p113 = scmp.eq.s32.totalorder %s12, 0
      %p114 = por %p112, %p113
      %p115 = scmp.ne.s32.totalorder %s104, %s107
      %p116 = scmp.eq.s32.totalorder %s17, 3
      %p117 = por %p115, %p116
      %p118 = scmp.ne.s32.totalorder %s107, %s108
      %p119 = scmp.eq.s32.totalorder %s17, 0
      %p120 = por %p118, %p119
      %p121 = scmp.ne.s32.totalorder %s107, %s108
      %p122 = scmp.eq.s32.totalorder %s18, 3
      %p123 = por %p121, %p122
      %p125 = scmp.ne.s32.totalorder %s108, %s124
      %p126 = scmp.eq.s32.totalorder %s18, 0
      %p127 = por %p125, %p126
      %p128 = scmp.le.s32.totalorder 1, %s12
      %p129 = scmp.lt.s32.totalorder %s12, 5
      %p130 = pnand %p128, %p129
      %p131 = pneg %p130
      // Predicated region
      $region9: #{tpu_custom_call.1} parent=5 // pred_check
        _
      $region10: #{tpu_custom_call.1} parent=5 // pred_check_branch
        %133 = sbr.rel (%p130) target = $region12
      $region11: #{tpu_custom_call.1} parent=5 // pred_region
        %s134 = ssub.s32 %s12, 1
        // Predicated region
        $region13: #{tpu_custom_call.1} parent=11 // pred_check
          %p135 = pneg %p71
        $region14: #{tpu_custom_call.1} parent=11 // pred_check_branch
          %137 = sbr.rel (%p135) target = $region16
        $region15: #{tpu_custom_call.1} parent=11 // pred_region
          _
        $region16: #{tpu_custom_call.1} parent=11 // pred_fallthru
          _
        // Predicated region
        $region17: #{tpu_custom_call.1} parent=11 // pred_check
          %p138 = pneg %p92
        $region18: #{tpu_custom_call.1} parent=11 // pred_check_branch
          %140 = sbr.rel (%p138) target = $region20
        $region19: #{tpu_custom_call.1} parent=11 // pred_region
          _
        $region20: #{tpu_custom_call.1} parent=11 // pred_fallthru
          _
      $region12: #{tpu_custom_call.1} parent=5 // pred_fallthru
        _
      %p141 = scmp.lt.s32.totalorder %s12, 4
      // Predicated region
      $region21: #{tpu_custom_call.1} parent=5 // pred_check
        %p142 = pneg %p141
      $region22: #{tpu_custom_call.1} parent=5 // pred_check_branch
        %144 = sbr.rel (%p142) target = $region24
      $region23: #{tpu_custom_call.1} parent=5 // pred_region
        // Predicated region
        $region25: #{tpu_custom_call.1} parent=23 // pred_check
          %p145 = pneg %p44
        $region26: #{tpu_custom_call.1} parent=23 // pred_check_branch
          %147 = sbr.rel (%p145) target = $region28
        $region27: #{tpu_custom_call.1} parent=23 // pred_region
          %p148 = scmp.lt.s32.totalorder %s19, 1
          %s149 = scalar_select %p148, %s19, 1
          %s150 = smul.addr %s149, 18
          %s151 = smul.addr %s150, 4
          %s152 = scalar_lea.vmem %s0, %s151
        $region28: #{tpu_custom_call.1} parent=23 // pred_fallthru
          _
      $region24: #{tpu_custom_call.1} parent=5 // pred_fallthru
        _
      %p153 = scmp.le.s32.totalorder 1, %s12
      %p154 = scmp.lt.s32.totalorder %s12, 5
      %p155 = pnand %p153, %p154
      %p156 = pneg %p155
      // Predicated region
      $region29: #{tpu_custom_call.1} parent=5 // pred_check
        _
      $region30: #{tpu_custom_call.1} parent=5 // pred_check_branch
        %158 = sbr.rel (%p155) target = $region32
      $region31: #{tpu_custom_call.1} parent=5 // pred_region
        %s159 = ssub.s32 %s12, 1
        %p160 = scmp.lt.s32.totalorder %s21, 1
        %s161 = scalar_select %p160, %s21, 1
        %s162 = smul.addr %s161, 18
        %s163 = smul.addr %s162, 4
        %s164 = scalar_lea.vmem %s0, %s163
        %p165 = pneg %p50
        %p166 = pneg %p47
        %p167 = pneg %p71
        %p168 = pneg %p68
        %p169 = pneg %p92
        %p170 = pneg %p89
        %p171 = pneg %p120
        %p172 = pneg %p117
        %s173 = sand.u32 %s107, 1
        %s174 = scalar_lea.sflag [#allocation3], %s173
        %s175 = sand.u32 %s107, 1
        %s176 = smul.addr %s175, 16
        %s177 = scalar_lea.vmem [#allocation2], %s176
        %p178 = scmp.lt.s32.totalorder %s21, 1
        %s179 = scalar_select %p178, %s21, 1
        %s180 = smul.addr %s179, 18
        %s181 = smul.addr %s180, 4
        %s182 = scalar_lea.vmem %s0, %s181
        %s183 = smul.u32 4, %s22
        %s185 = smul.u32 %s22, 4
        %s186 = smul.u32 %s185, 2
        %s187 = smul.addr %s186, 4
        %s188 = scalar_lea.vmem %s182, %s187
        %v189 = vld [vmem:[%s188] sm:$0xf]
        %v190 = vld [vmem:[%s188 + $0x8] sm:$0xf]
        %v191 = vld [vmem:[%s188 + $0x10] sm:$0xf]
        %v192 = vld [vmem:[%s188 + $0x18] sm:$0xf]
        %v193 = vld [vmem:[%s1] sm:$0xf]
        %v194 = vld [vmem:[%s1 + $0x4] sm:$0xf]
        %v195 = vld [vmem:[%s188 + $0x4] sm:$0x1]
        %v196 = vld [vmem:[%s188 + $0xc] sm:$0x1]
        %v197 = vld [vmem:[%s188 + $0x14] sm:$0x1]
        %v198 = vld [vmem:[%s188 + $0x1c] sm:$0x1]
        %vm199 = vsmask.f32 3328
        %vm200 = vsmask.f32 7440
        %vm201 = vmor %vm199, %vm200
        %v203 = vshrl.u32 %v189, 16
        %v205 = vrot.slane %v203, 4
        %v206 = vshll.u32 %v189, 16
        %v208 = vrot.slane %v206, 5
        %v209 = vor.u32 %v205, %v208
        %v210 = vrot.slane %v209, 4
        %v212 = vshll.u32 %v195, 16
        %v214 = vrot.slane %v212, 5
        %v215 = vsel %vm201, %v210, %v214
        %v217 = vshrl.u32 %v190, 16
        %v219 = vrot.slane %v217, 4
        %v220 = vshll.u32 %v190, 16
        %v222 = vrot.slane %v220, 5
        %v223 = vor.u32 %v219, %v222
        %v224 = vrot.slane %v223, 4
        %v226 = vshll.u32 %v196, 16
        %v228 = vrot.slane %v226, 5
        %v229 = vsel %vm201, %v224, %v228
        %v231 = vshrl.u32 %v191, 16
        %v233 = vrot.slane %v231, 4
        %v234 = vshll.u32 %v191, 16
        %v236 = vrot.slane %v234, 5
        %v237 = vor.u32 %v233, %v236
        %v238 = vrot.slane %v237, 4
        %v240 = vshll.u32 %v197, 16
        %v242 = vrot.slane %v240, 5
        %v243 = vsel %vm201, %v238, %v242
        %v245 = vshrl.u32 %v192, 16
        %v247 = vrot.slane %v245, 4
        %v248 = vshll.u32 %v192, 16
        %v250 = vrot.slane %v248, 5
        %v251 = vor.u32 %v247, %v250
        %v252 = vrot.slane %v251, 4
        %v254 = vshll.u32 %v198, 16
        %v256 = vrot.slane %v254, 5
        %v257 = vsel %vm201, %v252, %v256
        %s258 = scalar_lea.vmem %s1, 8
        %v259 = vld [vmem:[%s258] sm:$0xf]
        %v260 = vld [vmem:[%s258 + $0x4] sm:$0xf]
        %v261 = vunpack.c.l.b16 %v215
        %v262 = vunpack.c.l.b16 %v229
        %v263 = vunpack.c.l.b16 %v243
        %v264 = vunpack.c.l.b16 %v257
        %v265 = vpack.c.b16 %v262, %v261
        %v266 = vpack.c.b16 %v264, %v263
        %v269 = vunpack.c.l.b16 %v259
        %v270 = vunpack.c.l.b16 %v260
        %v271 = vpack.c.b16 %v270, %v269
        %vm273 = vcmask 130048
        %v275 = vsel %vm273, %v265, 0
        %v278 = vsel %vm273, %v266, 0
        %280 = vmatprep.subr.bf16.mxu0 0
        %281 = vmatpush1.bf16.msra.mxu0 0
        %282 = vmatprep.subr.bf16.mxu0 0
        %283 = vmatpush1.bf16.msra.mxu0 0
        %284 = vmatprep.subr.bf16.mxu0 0
        %285 = vmatpush1.bf16.msra.mxu0 0
        %286 = vmatprep.subr.bf16.mxu0 0
        %287 = vmatpush1.bf16.msra.mxu0 0
        %288 = vmatprep.subr.bf16.mxu0 0
        %289 = vmatpush1.bf16.msra.mxu0 0
        %290 = vmatprep.subr.bf16.mxu0 0
        %291 = vmatpush1.bf16.msra.mxu0 0
        %292 = vmatprep.subr.bf16.mxu0 0
        %293 = vmatpush1.bf16.msra.mxu0 0
        %294 = vmatprep.subr.bf16.mxu0 0
        %295 = vmatpush1.bf16.msra.mxu0 %v271
        %296 = vmatprep.subr.bf16.mxu0 0
        %297 = vmatpush2.bf16.msra.mxu0 0
        %298 = vmatprep.subr.bf16.mxu0 0
        %299 = vmatpush2.bf16.msra.mxu0 0
        %300 = vmatprep.subr.bf16.mxu0 0
        %301 = vmatpush2.bf16.msra.mxu0 0
        %302 = vmatprep.subr.bf16.mxu0 0
        %303 = vmatpush2.bf16.msra.mxu0 0
        %304 = vmatprep.subr.bf16.mxu0 0
        %305 = vmatpush2.bf16.msra.mxu0 0
        %306 = vmatprep.subr.bf16.mxu0 0
        %307 = vmatpush2.bf16.msra.mxu0 0
        %308 = vmatprep.subr.bf16.mxu0 0
        %309 = vmatpush2.bf16.msra.mxu0 0
        %310 = vmatprep.subr.bf16.mxu0 0
        %311 = vmatpush2.bf16.msra.mxu0 0
        %312 = vmatprep.mubr.bf16.mxu0 0
        %313 = vmatmul.mubr.bf16.gmra.mxu0 %v275
        %v314 = vpop.f32.mrf.mxu0
        %v315 = vadd.f32 0.0, %v314
        %v316 = vpop.f32.mrf.mxu0
        %v317 = vpop.f32.mrf.mxu0
        %v318 = vadd.f32 0.0, %v317
        %v319 = vpop.f32.mrf.mxu0
        %320 = vmatprep.mubr.bf16.mxu0 0
        %321 = vmatmul.mubr.bf16.gmra.mxu0 %v278
        %v322 = vpop.f32.mrf.mxu0
        %v323 = vadd.f32 0.0, %v322
        %v324 = vpop.f32.mrf.mxu0
        %v325 = vpop.f32.mrf.mxu0
        %v326 = vadd.f32 0.0, %v325
        %v327 = vpop.f32.mrf.mxu0
        %328 = vdwg.mxu0
        %v333 = vunpack.c.l.b16 %v189
        %v334 = vunpack.c.l.b16 %v190
        %v335 = vunpack.c.l.b16 %v191
        %v336 = vunpack.c.l.b16 %v192
        %v337 = vpack.c.b16 %v334, %v333
        %v338 = vpack.c.b16 %v336, %v335
        %v341 = vunpack.c.l.b16 %v193
        %v342 = vunpack.c.l.b16 %v194
        %v343 = vpack.c.b16 %v342, %v341
        %v346 = vsel %vm273, %v337, 0
        %v349 = vsel %vm273, %v338, 0
        %351 = vmatprep.subr.bf16.mxu0 0
        %352 = vmatpush1.bf16.msra.mxu0 0
        %353 = vmatprep.subr.bf16.mxu0 0
        %354 = vmatpush1.bf16.msra.mxu0 0
        %355 = vmatprep.subr.bf16.mxu0 0
        %356 = vmatpush1.bf16.msra.mxu0 0
        %357 = vmatprep.subr.bf16.mxu0 0
        %358 = vmatpush1.bf16.msra.mxu0 0
        %359 = vmatprep.subr.bf16.mxu0 0
        %360 = vmatpush1.bf16.msra.mxu0 0
        %361 = vmatprep.subr.bf16.mxu0 0
        %362 = vmatpush1.bf16.msra.mxu0 0
        %363 = vmatprep.subr.bf16.mxu0 0
        %364 = vmatpush1.bf16.msra.mxu0 0
        %365 = vmatprep.subr.bf16.mxu0 0
        %366 = vmatpush1.bf16.msra.mxu0 %v343
        %367 = vmatprep.subr.bf16.mxu0 0
        %368 = vmatpush2.bf16.msra.mxu0 0
        %369 = vmatprep.subr.bf16.mxu0 0
        %370 = vmatpush2.bf16.msra.mxu0 0
        %371 = vmatprep.subr.bf16.mxu0 0
        %372 = vmatpush2.bf16.msra.mxu0 0
        %373 = vmatprep.subr.bf16.mxu0 0
        %374 = vmatpush2.bf16.msra.mxu0 0
        %375 = vmatprep.subr.bf16.mxu0 0
        %376 = vmatpush2.bf16.msra.mxu0 0
        %377 = vmatprep.subr.bf16.mxu0 0
        %378 = vmatpush2.bf16.msra.mxu0 0
        %379 = vmatprep.subr.bf16.mxu0 0
        %380 = vmatpush2.bf16.msra.mxu0 0
        %381 = vmatprep.subr.bf16.mxu0 0
        %382 = vmatpush2.bf16.msra.mxu0 0
        %383 = vmatprep.mubr.bf16.mxu0 0
        %384 = vmatmul.mubr.bf16.gmra.mxu0 %v346
        %v385 = vpop.f32.mrf.mxu0
        %v386 = vadd.f32 %v315, %v385
        %v387 = vpop.f32.mrf.mxu0
        %v388 = vpop.f32.mrf.mxu0
        %v389 = vadd.f32 %v318, %v388
        %v390 = vpop.f32.mrf.mxu0
        %391 = vmatprep.mubr.bf16.mxu0 0
        %392 = vmatmul.mubr.bf16.gmra.mxu0 %v349
        %v393 = vpop.f32.mrf.mxu0
        %v394 = vadd.f32 %v323, %v393
        %v395 = vpop.f32.mrf.mxu0
        %v396 = vpop.f32.mrf.mxu0
        %v397 = vadd.f32 %v326, %v396
        %v398 = vpop.f32.mrf.mxu0
        %399 = vdwg.mxu0
        %s400 = sadd.s32 %s185, 1
        %s401 = smul.u32 %s400, 2
        %s402 = smul.addr %s401, 4
        %s403 = scalar_lea.vmem %s182, %s402
        %v404 = vld [vmem:[%s403] sm:$0xf]
        %v405 = vld [vmem:[%s403 + $0x8] sm:$0xf]
        %v406 = vld [vmem:[%s403 + $0x10] sm:$0xf]
        %v407 = vld [vmem:[%s403 + $0x18] sm:$0xf]
        %s408 = scalar_lea.vmem %s1, 16
        %v409 = vld [vmem:[%s408] sm:$0xf]
        %v410 = vld [vmem:[%s408 + $0x4] sm:$0xf]
        %v415 = vunpack.c.l.b16 %v404
        %v416 = vunpack.c.l.b16 %v405
        %v417 = vunpack.c.l.b16 %v406
        %v418 = vunpack.c.l.b16 %v407
        %v419 = vpack.c.b16 %v416, %v415
        %v420 = vpack.c.b16 %v418, %v417
        %v423 = vunpack.c.l.b16 %v409
        %v424 = vunpack.c.l.b16 %v410
        %v425 = vpack.c.b16 %v424, %v423
        %v428 = vsel %vm273, %v419, 0
        %v431 = vsel %vm273, %v420, 0
        %433 = vmatprep.subr.bf16.mxu0 0
        %434 = vmatpush1.bf16.msra.mxu0 0
        %435 = vmatprep.subr.bf16.mxu0 0
        %436 = vmatpush1.bf16.msra.mxu0 0
        %437 = vmatprep.subr.bf16.mxu0 0
        %438 = vmatpush1.bf16.msra.mxu0 0
        %439 = vmatprep.subr.bf16.mxu0 0
        %440 = vmatpush1.bf16.msra.mxu0 0
        %441 = vmatprep.subr.bf16.mxu0 0
        %442 = vmatpush1.bf16.msra.mxu0 0
        %443 = vmatprep.subr.bf16.mxu0 0
        %444 = vmatpush1.bf16.msra.mxu0 0
        %445 = vmatprep.subr.bf16.mxu0 0
        %446 = vmatpush1.bf16.msra.mxu0 0
        %447 = vmatprep.subr.bf16.mxu0 0
        %448 = vmatpush1.bf16.msra.mxu0 %v425
        %449 = vmatprep.subr.bf16.mxu0 0
        %450 = vmatpush2.bf16.msra.mxu0 0
        %451 = vmatprep.subr.bf16.mxu0 0
        %452 = vmatpush2.bf16.msra.mxu0 0
        %453 = vmatprep.subr.bf16.mxu0 0
        %454 = vmatpush2.bf16.msra.mxu0 0
        %455 = vmatprep.subr.bf16.mxu0 0
        %456 = vmatpush2.bf16.msra.mxu0 0
        %457 = vmatprep.subr.bf16.mxu0 0
        %458 = vmatpush2.bf16.msra.mxu0 0
        %459 = vmatprep.subr.bf16.mxu0 0
        %460 = vmatpush2.bf16.msra.mxu0 0
        %461 = vmatprep.subr.bf16.mxu0 0
        %462 = vmatpush2.bf16.msra.mxu0 0
        %463 = vmatprep.subr.bf16.mxu0 0
        %464 = vmatpush2.bf16.msra.mxu0 0
        %465 = vmatprep.mubr.bf16.mxu0 0
        %466 = vmatmul.mubr.bf16.gmra.mxu0 %v428
        %v467 = vpop.f32.mrf.mxu0
        %v468 = vadd.f32 0.0, %v467
        %v469 = vpop.f32.mrf.mxu0
        %v470 = vpop.f32.mrf.mxu0
        %v471 = vadd.f32 0.0, %v470
        %v472 = vpop.f32.mrf.mxu0
        %473 = vmatprep.mubr.bf16.mxu0 0
        %474 = vmatmul.mubr.bf16.gmra.mxu0 %v431
        %v475 = vpop.f32.mrf.mxu0
        %v476 = vadd.f32 0.0, %v475
        %v477 = vpop.f32.mrf.mxu0
        %v478 = vpop.f32.mrf.mxu0
        %v479 = vadd.f32 0.0, %v478
        %v480 = vpop.f32.mrf.mxu0
        %481 = vdwg.mxu0
        %v482 = vadd.f32 %v386, %v468
        %v483 = vadd.f32 %v389, %v471
        %v484 = vadd.f32 %v394, %v476
        %v485 = vadd.f32 %v397, %v479
        %v486 = vld [vmem:[%s403] sm:$0xf]
        %v487 = vld [vmem:[%s403 + $0x4] sm:$0x1]
        %v488 = vld [vmem:[%s403 + $0x8] sm:$0xf]
        %v489 = vld [vmem:[%s403 + $0xc] sm:$0x1]
        %v490 = vld [vmem:[%s403 + $0x10] sm:$0xf]
        %v491 = vld [vmem:[%s403 + $0x14] sm:$0x1]
        %v492 = vld [vmem:[%s403 + $0x18] sm:$0xf]
        %v493 = vld [vmem:[%s403 + $0x1c] sm:$0x1]
        %v495 = vshrl.u32 %v486, 16
        %v497 = vrot.slane %v495, 4
        %v498 = vshll.u32 %v486, 16
        %v500 = vrot.slane %v498, 5
        %v501 = vor.u32 %v497, %v500
        %v502 = vrot.slane %v501, 4
        %v504 = vshll.u32 %v487, 16
        %v506 = vrot.slane %v504, 5
        %v507 = vsel %vm201, %v502, %v506
        %v509 = vshrl.u32 %v488, 16
        %v511 = vrot.slane %v509, 4
        %v512 = vshll.u32 %v488, 16
        %v514 = vrot.slane %v512, 5
        %v515 = vor.u32 %v511, %v514
        %v516 = vrot.slane %v515, 4
        %v518 = vshll.u32 %v489, 16
        %v520 = vrot.slane %v518, 5
        %v521 = vsel %vm201, %v516, %v520
        %v523 = vshrl.u32 %v490, 16
        %v525 = vrot.slane %v523, 4
        %v526 = vshll.u32 %v490, 16
        %v528 = vrot.slane %v526, 5
        %v529 = vor.u32 %v525, %v528
        %v530 = vrot.slane %v529, 4
        %v532 = vshll.u32 %v491, 16
        %v534 = vrot.slane %v532, 5
        %v535 = vsel %vm201, %v530, %v534
        %v537 = vshrl.u32 %v492, 16
        %v539 = vrot.slane %v537, 4
        %v540 = vshll.u32 %v492, 16
        %v542 = vrot.slane %v540, 5
        %v543 = vor.u32 %v539, %v542
        %v544 = vrot.slane %v543, 4
        %v546 = vshll.u32 %v493, 16
        %v548 = vrot.slane %v546, 5
        %v549 = vsel %vm201, %v544, %v548
        %s550 = scalar_lea.vmem %s1, 24
        %v551 = vld [vmem:[%s550] sm:$0xf]
        %v552 = vld [vmem:[%s550 + $0x4] sm:$0xf]
        %v553 = vunpack.c.l.b16 %v507
        %v554 = vunpack.c.l.b16 %v521
        %v555 = vunpack.c.l.b16 %v535
        %v556 = vunpack.c.l.b16 %v549
        %v557 = vpack.c.b16 %v554, %v553
        %v558 = vpack.c.b16 %v556, %v555
        %v561 = vunpack.c.l.b16 %v551
        %v562 = vunpack.c.l.b16 %v552
        %v563 = vpack.c.b16 %v562, %v561
        %v566 = vsel %vm273, %v557, 0
        %v569 = vsel %vm273, %v558, 0
        %571 = vmatprep.subr.bf16.mxu0 0
        %572 = vmatpush1.bf16.msra.mxu0 0
        %573 = vmatprep.subr.bf16.mxu0 0
        %574 = vmatpush1.bf16.msra.mxu0 0
        %575 = vmatprep.subr.bf16.mxu0 0
        %576 = vmatpush1.bf16.msra.mxu0 0
        %577 = vmatprep.subr.bf16.mxu0 0
        %578 = vmatpush1.bf16.msra.mxu0 0
        %579 = vmatprep.subr.bf16.mxu0 0
        %580 = vmatpush1.bf16.msra.mxu0 0
        %581 = vmatprep.subr.bf16.mxu0 0
        %582 = vmatpush1.bf16.msra.mxu0 0
        %583 = vmatprep.subr.bf16.mxu0 0
        %584 = vmatpush1.bf16.msra.mxu0 0
        %585 = vmatprep.subr.bf16.mxu0 0
        %586 = vmatpush1.bf16.msra.mxu0 %v563
        %587 = vmatprep.subr.bf16.mxu0 0
        %588 = vmatpush2.bf16.msra.mxu0 0
        %589 = vmatprep.subr.bf16.mxu0 0
        %590 = vmatpush2.bf16.msra.mxu0 0
        %591 = vmatprep.subr.bf16.mxu0 0
        %592 = vmatpush2.bf16.msra.mxu0 0
        %593 = vmatprep.subr.bf16.mxu0 0
        %594 = vmatpush2.bf16.msra.mxu0 0
        %595 = vmatprep.subr.bf16.mxu0 0
        %596 = vmatpush2.bf16.msra.mxu0 0
        %597 = vmatprep.subr.bf16.mxu0 0
        %598 = vmatpush2.bf16.msra.mxu0 0
        %599 = vmatprep.subr.bf16.mxu0 0
        %600 = vmatpush2.bf16.msra.mxu0 0
        %601 = vmatprep.subr.bf16.mxu0 0
        %602 = vmatpush2.bf16.msra.mxu0 0
        %603 = vmatprep.mubr.bf16.mxu0 0
        %604 = vmatmul.mubr.bf16.gmra.mxu0 %v566
        %v605 = vpop.f32.mrf.mxu0
        %v606 = vadd.f32 0.0, %v605
        %v607 = vpop.f32.mrf.mxu0
        %v608 = vpop.f32.mrf.mxu0
        %v609 = vadd.f32 0.0, %v608
        %v610 = vpop.f32.mrf.mxu0
        %611 = vmatprep.mubr.bf16.mxu0 0
        %612 = vmatmul.mubr.bf16.gmra.mxu0 %v569
        %v613 = vpop.f32.mrf.mxu0
        %v614 = vadd.f32 0.0, %v613
        %v615 = vpop.f32.mrf.mxu0
        %v616 = vpop.f32.mrf.mxu0
        %v617 = vadd.f32 0.0, %v616
        %v618 = vpop.f32.mrf.mxu0
        %619 = vdwg.mxu0
        %v620 = vadd.f32 %v482, %v606
        %v621 = vadd.f32 %v483, %v609
        %v622 = vadd.f32 %v484, %v614
        %v623 = vadd.f32 %v485, %v617
        %v624 = vld [vmem:[%s2] sm:$0x1]
        %v625 = vlaneseq
        %v626 = vshrl.u32 %v625, 7
        %v627 = vsub.s32 0, %v626
        %v628 = vrot.slane %v624, %v627
        %v629 = vadd.f32 %v620, %v628
        %v630 = vadd.f32 %v621, %v628
        %v631 = vadd.f32 %v622, %v628
        %v632 = vadd.f32 %v623, %v628
        %vm633 = vcmask 64512
        %v634 = vsel %vm633, %v629, 0.0
        %635 = vadd.xlane.f32.xlu0 %v634
        %v636 = vpop.xlane.xlu0 %635
        %v637 = vsel %vm633, %v630, 0.0
        %638 = vadd.xlane.f32.xlu0 %v637
        %v639 = vpop.xlane.xlu0 %638
        %v640 = vsel %vm633, %v631, 0.0
        %641 = vadd.xlane.f32.xlu0 %v640
        %v642 = vpop.xlane.xlu0 %641
        %v643 = vsel %vm633, %v632, 0.0
        %644 = vadd.xlane.f32.xlu0 %v643
        %v645 = vpop.xlane.xlu0 %644
        %v646 = vrcp.pop 8.0
        %v647 = vmul.f32 %v636, %v646
        %v648 = vmul.f32 %v639, %v646
        %v649 = vmul.f32 %v642, %v646
        %v650 = vmul.f32 %v645, %v646
        %v651 = vsub.f32 %v629, %v647
        %v652 = vsub.f32 %v630, %v648
        %v653 = vsub.f32 %v631, %v649
        %v654 = vsub.f32 %v632, %v650
        %v655 = vmul.f32 %v651, %v651
        %v656 = vmul.f32 %v652, %v652
        %v657 = vmul.f32 %v653, %v653
        %v658 = vmul.f32 %v654, %v654
        %v659 = vsel %vm633, %v655, 0.0
        %660 = vadd.xlane.f32.xlu0 %v659
        %v661 = vpop.xlane.xlu0 %660
        %v662 = vsel %vm633, %v656, 0.0
        %663 = vadd.xlane.f32.xlu0 %v662
        %v664 = vpop.xlane.xlu0 %663
        %v665 = vsel %vm633, %v657, 0.0
        %666 = vadd.xlane.f32.xlu0 %v665
        %v667 = vpop.xlane.xlu0 %666
        %v668 = vsel %vm633, %v658, 0.0
        %669 = vadd.xlane.f32.xlu0 %v668
        %v670 = vpop.xlane.xlu0 %669
        %v671 = vmul.f32 %v661, %v646
        %v672 = vmul.f32 %v664, %v646
        %v673 = vmul.f32 %v667, %v646
        %v674 = vmul.f32 %v670, %v646
        %v675 = vadd.f32 %v671, 1e-05
        %v676 = vadd.f32 %v672, 1e-05
        %v677 = vadd.f32 %v673, 1e-05
        %v678 = vadd.f32 %v674, 1e-05
        %v679 = vrsqrt.pop %v675
        %v680 = vrsqrt.pop %v676
        %v681 = vrsqrt.pop %v677
        %v682 = vrsqrt.pop %v678
        %v683 = vmul.f32 %v651, %v679
        %v684 = vmul.f32 %v652, %v680
        %v685 = vmul.f32 %v653, %v681
        %v686 = vmul.f32 %v654, %v682
        %v687 = vld [vmem:[%s2 + $0x1] sm:$0x1]
        %v688 = vlaneseq
        %v689 = vshrl.u32 %v688, 7
        %v690 = vsub.s32 0, %v689
        %v691 = vrot.slane %v687, %v690
        %v692 = vmul.f32 %v683, %v691
        %v693 = vmul.f32 %v684, %v691
        %v694 = vmul.f32 %v685, %v691
        %v695 = vmul.f32 %v686, %v691
        %v696 = vld [vmem:[%s2 + $0x2] sm:$0x1]
        %v697 = vlaneseq
        %v698 = vshrl.u32 %v697, 7
        %v699 = vsub.s32 0, %v698
        %v700 = vrot.slane %v696, %v699
        %v701 = vadd.f32 %v692, %v700
        %v702 = vadd.f32 %v693, %v700
        %v703 = vadd.f32 %v694, %v700
        %v704 = vadd.f32 %v695, %v700
        %v705 = vmul.f32 %v701, 0.5
        %v706 = vmul.f32 %v702, 0.5
        %v707 = vmul.f32 %v703, 0.5
        %v708 = vmul.f32 %v704, 0.5
        %v709 = vmul.f32 %v701, 0.70710677
        %v710 = vmul.f32 %v702, 0.70710677
        %v711 = vmul.f32 %v703, 0.70710677
        %v712 = vmul.f32 %v704, 0.70710677
        %vm713 = vcmp.ge.f32.partialorder %v709, 0.0
        %vm714 = vcmp.ge.f32.partialorder %v710, 0.0
        %vm715 = vcmp.ge.f32.partialorder %v711, 0.0
        %vm716 = vcmp.ge.f32.partialorder %v712, 0.0
        %v717 = vsel %vm713, 1.0, -1.0
        %v718 = vsel %vm714, 1.0, -1.0
        %v719 = vsel %vm715, 1.0, -1.0
        %v720 = vsel %vm716, 1.0, -1.0
        %v721 = vand.u32 2147483647, %v709
        %v722 = vand.u32 2147483647, %v710
        %v723 = vand.u32 2147483647, %v711
        %v724 = vand.u32 2147483647, %v712
        %v725 = vmul.f32 %v721, 0.3275911
        %v726 = vmul.f32 %v722, 0.3275911
        %v727 = vmul.f32 %v723, 0.3275911
        %v728 = vmul.f32 %v724, 0.3275911
        %v729 = vadd.f32 %v725, 1.0
        %v730 = vadd.f32 %v726, 1.0
        %v731 = vadd.f32 %v727, 1.0
        %v732 = vadd.f32 %v728, 1.0
        %v733 = vrcp.pop %v729
        %v734 = vmul.f32 1.0, %v733
        %v735 = vrcp.pop %v730
        %v736 = vmul.f32 1.0, %v735
        %v737 = vrcp.pop %v731
        %v738 = vmul.f32 1.0, %v737
        %v739 = vrcp.pop %v732
        %v740 = vmul.f32 1.0, %v739
        %v741 = vmul.f32 %v734, 1.0614054
        %v742 = vmul.f32 %v736, 1.0614054
        %v743 = vmul.f32 %v738, 1.0614054
        %v744 = vmul.f32 %v740, 1.0614054
        %v745 = vadd.f32 %v741, -1.4531521
        %v746 = vadd.f32 %v742, -1.4531521
        %v747 = vadd.f32 %v743, -1.4531521
        %v748 = vadd.f32 %v744, -1.4531521
        %v749 = vmul.f32 %v745, %v734
        %v750 = vmul.f32 %v746, %v736
        %v751 = vmul.f32 %v747, %v738
        %v752 = vmul.f32 %v748, %v740
        %v753 = vadd.f32 %v749, 1.4214138
        %v754 = vadd.f32 %v750, 1.4214138
        %v755 = vadd.f32 %v751, 1.4214138
        %v756 = vadd.f32 %v752, 1.4214138
        %v757 = vmul.f32 %v753, %v734
        %v758 = vmul.f32 %v754, %v736
        %v759 = vmul.f32 %v755, %v738
        %v760 = vmul.f32 %v756, %v740
        %v761 = vadd.f32 %v757, -0.28449672
        %v762 = vadd.f32 %v758, -0.28449672
        %v763 = vadd.f32 %v759, -0.28449672
        %v764 = vadd.f32 %v760, -0.28449672
        %v765 = vmul.f32 %v761, %v734
        %v766 = vmul.f32 %v762, %v736
        %v767 = vmul.f32 %v763, %v738
        %v768 = vmul.f32 %v764, %v740
        %v769 = vadd.f32 %v765, 0.2548296
        %v770 = vadd.f32 %v766, 0.2548296
        %v771 = vadd.f32 %v767, 0.2548296
        %v772 = vadd.f32 %v768, 0.2548296
        %v773 = vmul.f32 %v769, %v734
        %v774 = vmul.f32 %v770, %v736
        %v775 = vmul.f32 %v771, %v738
        %v776 = vmul.f32 %v772, %v740
        %v777 = vsub.f32 0.0, %v721
        %v778 = vsub.f32 0.0, %v722
        %v779 = vsub.f32 0.0, %v723
        %v780 = vsub.f32 0.0, %v724
        %v781 = vmul.f32 %v777, %v721
        %v782 = vmul.f32 %v778, %v722
        %v783 = vmul.f32 %v779, %v723
        %v784 = vmul.f32 %v780, %v724
        %v785 = vmul.f32 %v781, 1.442695
        %v786 = vpow.pop %v785
        %v787 = vmul.f32 %v782, 1.442695
        %v788 = vpow.pop %v787
        %v789 = vmul.f32 %v783, 1.442695
        %v790 = vpow.pop %v789
        %v791 = vmul.f32 %v784, 1.442695
        %v792 = vpow.pop %v791
        %v793 = vmul.f32 %v773, %v786
        %v794 = vmul.f32 %v774, %v788
        %v795 = vmul.f32 %v775, %v790
        %v796 = vmul.f32 %v776, %v792
        %v797 = vsub.f32 1.0, %v793
        %v798 = vsub.f32 1.0, %v794
        %v799 = vsub.f32 1.0, %v795
        %v800 = vsub.f32 1.0, %v796
        %v801 = vmul.f32 %v717, %v797
        %v802 = vmul.f32 %v718, %v798
        %v803 = vmul.f32 %v719, %v799
        %v804 = vmul.f32 %v720, %v800
        %v805 = vadd.f32 %v801, 1.0
        %v806 = vadd.f32 %v802, 1.0
        %v807 = vadd.f32 %v803, 1.0
        %v808 = vadd.f32 %v804, 1.0
        %v809 = vmul.f32 %v705, %v805
        %v810 = vmul.f32 %v706, %v806
        %v811 = vmul.f32 %v707, %v807
        %v812 = vmul.f32 %v708, %v808
        %v813 = vpack.c.bf16 %v809, %v809
        %v814 = vpack.c.bf16 %v810, %v810
        %v815 = vpack.c.bf16 %v811, %v811
        %v816 = vpack.c.bf16 %v812, %v812
        %vm817 = vcmask 60416
        %818 = vst.msk [vmem:[%s177] sm:$0xf] %vm817, %v813
        %819 = vst.msk [vmem:[%s177 + $0x4] sm:$0xf] %vm817, %v814
        %820 = vst.msk [vmem:[%s177 + $0x8] sm:$0xf] %vm817, %v815
        %821 = vst.msk [vmem:[%s177 + $0xc] sm:$0xf] %vm817, %v816
        %s822 = sand.u32 %s107, 1
        %s823 = scalar_lea.sflag [#allocation3], %s822
        %s824 = sand.u32 %s107, 1
        %s825 = smul.addr %s824, 16
        %s826 = scalar_lea.vmem [#allocation2], %s825
        // Predicated region
        $region33: #{tpu_custom_call.1} parent=31 // pred_check
          %p827 = pneg %p117
        $region34: #{tpu_custom_call.1} parent=31 // pred_check_branch
          %829 = sbr.rel (%p827) target = $region36
        $region35: #{tpu_custom_call.1} parent=31 // pred_region
          %s830 = smul.u32 4, %s22
          %s832 = ssub.s32 256, 256
          %833 = vsyncadd %s823, %s832
          %s834 = smul.addr %s21, 8
          %s835 = sadd.s32 %s830, %s834
          %s836 = smul.addr %s835, 64
          %s837 = scalar_lea.hbm %s3, %s836
          %s838 = sshll.u32 %s826, 4
          %s839 = int_to_ptr.vmem [resolvable:$true] %s838
          %844 = dma.vmem_to_hbm [thread:$0]  %s839, 256, %s837, %s823, 64, 64, 4
        $region36: #{tpu_custom_call.1} parent=31 // pred_fallthru
          _
      $region32: #{tpu_custom_call.1} parent=5 // pred_fallthru
        _
      %p845 = scmp.le.s32.totalorder 2, %s12
      // Predicated region
      $region37: #{tpu_custom_call.1} parent=5 // pred_check
        %p846 = pneg %p845
      $region38: #{tpu_custom_call.1} parent=5 // pred_check_branch
        %848 = sbr.rel (%p846) target = $region40
      $region39: #{tpu_custom_call.1} parent=5 // pred_region
        %s849 = ssub.s32 %s12, 2
        // Predicated region
        $region41: #{tpu_custom_call.1} parent=39 // pred_check
          %p850 = pneg %p123
        $region42: #{tpu_custom_call.1} parent=39 // pred_check_branch
          %852 = sbr.rel (%p850) target = $region44
        $region43: #{tpu_custom_call.1} parent=39 // pred_region
          %s853 = sand.u32 %s108, 1
          %s854 = scalar_lea.sflag [#allocation3], %s853
          %s855 = sand.u32 %s108, 1
          %s856 = smul.addr %s855, 16
          %s857 = scalar_lea.vmem [#allocation2], %s856
          %858 = dma.done %s854, 256
        $region44: #{tpu_custom_call.1} parent=39 // pred_fallthru
          _
      $region40: #{tpu_custom_call.1} parent=5 // pred_fallthru
        _
    $region6: #{tpu_custom_call.1} parent=1 // loop_footer
      %s16 = sadd.s32 1, %s12
    $region7: #{tpu_custom_call.1} parent=1 // loop_footer_branch
      %11 = sbr.rel target = $region3
    $region8: #{tpu_custom_call.1} parent=1 // loop_exit
      _
    %859 = vsyncpa [#allocation3], 1
    %s860 = scalar_lea.sflag [#allocation3], 1
    %861 = vsyncpa %s860, 1

</llo_original>
